<compile_context>
chip_gen: v6e
topology: v6e:2x2x1
jax: 0.10.0
libtpu: 0.0.40
codegen_flags: <defaults>
</compile_context>

<pallas_src>
import jax
import jax.numpy as jnp
from jax.experimental import pallas as pl
from jax.experimental.pallas import tpu as pltpu

EPS = 1e-5  # nn.BatchNorm1d default eps


def _mlp_kernel(x_ref, w0_ref, b0_ref, w1_ref, b1_ref, w2_ref, b2_ref, o_ref):
    x = x_ref[...]

    # --- input_layer (+ folded bn_input) + ReLU --------------------------
    h = jnp.dot(x, w0_ref[...], preferred_element_type=jnp.float32) + b0_ref[...]
    h = jnp.maximum(h, 0.0)
    # Dropout(0.2): identity in eval mode (predict()).

    # --- hidden_layers[0] (+ folded bn_layers[0]) + ReLU ------------------
    h1 = jnp.dot(h, w1_ref[...], preferred_element_type=jnp.float32) + b1_ref[...]
    h1 = jnp.maximum(h1, 0.0)
    # Residual add skipped: (B, 128) vs (B, 64) shapes differ (matches PyTorch branch).
    # Dropout(0.2): identity in eval mode.

    # --- output_layer: N=1 -> VPU broadcast-mul + lane reduce (keep MXU free) ---
    o_ref[...] = jnp.sum(h1 * w2_ref[...], axis=-1, keepdims=True) + b2_ref[...]


def enhanced_model_forward(x, params, *, tb=512):
    """x: [B, input_dim] float32. params: dict of weights (see init_params)."""
    B, in_dim = x.shape

    # --- Fold eval-mode BatchNorm into the Linear layers (done once, outside kernel) ---
    s0 = params["g0"] * jax.lax.rsqrt(params["rv0"] + EPS)            # (1, H0)
    w0f = params["w0"] * s0                                           # (in, H0)
    b0f = (params["b0"] - params["rm0"]) * s0 + params["beta0"]       # (1, H0)
    s1 = params["g1"] * jax.lax.rsqrt(params["rv1"] + EPS)            # (1, H1)
    w1f = params["w1"] * s1                                           # (H0, H1)
    b1f = (params["b1"] - params["rm1"]) * s1 + params["beta1"]       # (1, H1)
    w2row = params["w2"].reshape(1, -1)                               # (1, H1)
    b2 = params["b2"].reshape(1, 1)                                   # (1, 1)

    H0 = w0f.shape[1]
    H1 = w1f.shape[1]

    # --- Batch tiling: multiple of 8 sublanes; pad B up to a tile multiple ---
    tb = max(8, min(tb, pl.cdiv(B, 8) * 8))
    b_pad = pl.cdiv(B, tb) * tb
    if b_pad != B:
        x = jnp.pad(x, ((0, b_pad - B), (0, 0)))
    grid = (b_pad // tb,)

    flops = 2 * b_pad * (in_dim * H0 + H0 * H1 + H1)
    bytes_accessed = 4 * (
        b_pad * in_dim + in_dim * H0 + H0 + H0 * H1 + H1 + H1 + 1 + b_pad
    )

    out = pl.pallas_call(
        _mlp_kernel,
        out_shape=jax.ShapeDtypeStruct((b_pad, 1), jnp.float32),
        grid=grid,
        in_specs=[
            pl.BlockSpec((tb, in_dim), lambda i: (i, 0)),   # x tile (pipelined)
            pl.BlockSpec((in_dim, H0), lambda i: (0, 0)),   # weights stay resident
            pl.BlockSpec((1, H0), lambda i: (0, 0)),
            pl.BlockSpec((H0, H1), lambda i: (0, 0)),
            pl.BlockSpec((1, H1), lambda i: (0, 0)),
            pl.BlockSpec((1, H1), lambda i: (0, 0)),
            pl.BlockSpec((1, 1), lambda i: (0, 0)),
        ],
        out_specs=pl.BlockSpec((tb, 1), lambda i: (i, 0)),
        compiler_params=pltpu.CompilerParams(
            dimension_semantics=("parallel",)),
        cost_estimate=pl.CostEstimate(
            flops=flops, transcendentals=0, bytes_accessed=bytes_accessed),
    )(x, w0f, b0f, w1f, b1f, w2row, b2)

    return out[:B]


def init_params(key, input_dim, hidden_dims=(128, 64)):
    """Deterministic init mimicking PyTorch defaults (Linear: U(-1/sqrt(fan_in), +)),
    BN gamma=1, beta=0; running stats given nontrivial deterministic values."""
    h0, h1 = hidden_dims
    k = jax.random.split(key, 8)

    def lin(kk, fan_in, fan_out):
        bound = 1.0 / jnp.sqrt(fan_in)
        kw, kb = jax.random.split(kk)
        # stored as [in, out] (transposed relative to torch's [out, in])
        w = jax.random.uniform(kw, (fan_in, fan_out), jnp.float32, -bound, bound)
        b = jax.random.uniform(kb, (1, fan_out), jnp.float32, -bound, bound)
        return w, b

    w0, b0 = lin(k[0], input_dim, h0)
    w1, b1 = lin(k[1], h0, h1)
    w2, b2 = lin(k[2], h1, 1)

    params = dict(
        w0=w0, b0=b0,
        g0=jnp.ones((1, h0), jnp.float32), beta0=jnp.zeros((1, h0), jnp.float32),
        rm0=0.1 * jax.random.normal(k[3], (1, h0), jnp.float32),
        rv0=1.0 + 0.1 * jax.random.uniform(k[4], (1, h0), jnp.float32),
        w1=w1, b1=b1,
        g1=jnp.ones((1, h1), jnp.float32), beta1=jnp.zeros((1, h1), jnp.float32),
        rm1=0.1 * jax.random.normal(k[5], (1, h1), jnp.float32),
        rv1=1.0 + 0.1 * jax.random.uniform(k[6], (1, h1), jnp.float32),
        w2=w2, b2=b2,
    )
    return params


def _reference_forward(x, p):
    """Pure-JAX reference (un-folded BN) for a sanity check."""
    h = x @ p["w0"] + p["b0"]
    h = (h - p["rm0"]) / jnp.sqrt(p["rv0"] + EPS) * p["g0"] + p["beta0"]
    h = jnp.maximum(h, 0.0)
    h1 = h @ p["w1"] + p["b1"]
    h1 = (h1 - p["rm1"]) / jnp.sqrt(p["rv1"] + EPS) * p["g1"] + p["beta1"]
    h1 = jnp.maximum(h1, 0.0)
    return h1 @ p["w2"] + p["b2"]


if __name__ == "__main__":
    key = jax.random.PRNGKey(0)
    kx, kp = jax.random.split(key)

    B, input_dim = 8, 32
    x = jax.random.normal(kx, (B, input_dim), jnp.float32)
    params = init_params(kp, input_dim, hidden_dims=(128, 64))

    out = enhanced_model_forward(x, params)
    out = jax.block_until_ready(out)

    ref = _reference_forward(x, params)
    assert out.shape == (B, 1)
    assert jnp.allclose(out, ref, atol=1e-4, rtol=1e-4)

    print("KERNEL_OK")
</pallas_src>

<mosaic_0001>
module attributes {stable_mosaic.version = 11 : i64} {
  func.func @_mlp_kernel(%arg0: i32, %arg1: memref<8x32xf32, #tpu.memory_space<vmem>>, %arg2: memref<32x128xf32, #tpu.memory_space<vmem>>, %arg3: memref<1x128xf32, #tpu.memory_space<vmem>>, %arg4: memref<128x64xf32, #tpu.memory_space<vmem>>, %arg5: memref<1x64xf32, #tpu.memory_space<vmem>>, %arg6: memref<1x64xf32, #tpu.memory_space<vmem>>, %arg7: memref<1x1xf32, #tpu.memory_space<vmem>>, %arg8: memref<8x1xf32, #tpu.memory_space<vmem>>) attributes {dimension_semantics = [#tpu.dimension_semantics<parallel>], iteration_bounds = array<i64: 1>, scalar_prefetch = 0 : i64, scratch_operands = 0 : i64, tpu.core_type = #tpu.core_type<tc>, window_params = [{transform_indices = @transform_0, window_bounds = array<i64: 8, 32>}, {pipeline_mode = #tpu.pipeline_mode<synchronous>, transform_indices = @transform_1, window_bounds = array<i64: 32, 128>}, {pipeline_mode = #tpu.pipeline_mode<synchronous>, transform_indices = @transform_2, window_bounds = array<i64: 1, 128>}, {pipeline_mode = #tpu.pipeline_mode<synchronous>, transform_indices = @transform_3, window_bounds = array<i64: 128, 64>}, {pipeline_mode = #tpu.pipeline_mode<synchronous>, transform_indices = @transform_4, window_bounds = array<i64: 1, 64>}, {pipeline_mode = #tpu.pipeline_mode<synchronous>, transform_indices = @transform_5, window_bounds = array<i64: 1, 64>}, {pipeline_mode = #tpu.pipeline_mode<synchronous>, transform_indices = @transform_6, window_bounds = array<i64: 1, 1>}, {transform_indices = @transform_7, window_bounds = array<i64: 8, 1>}]} {
    %c0 = arith.constant 0 : index
    %c0_0 = arith.constant 0 : index
    %0 = vector.load %arg1[%c0, %c0_0] : memref<8x32xf32, #tpu.memory_space<vmem>>, vector<8x32xf32>
    %c0_1 = arith.constant 0 : index
    %c0_2 = arith.constant 0 : index
    %1 = vector.load %arg2[%c0_1, %c0_2] : memref<32x128xf32, #tpu.memory_space<vmem>>, vector<32x128xf32>
    %cst = arith.constant dense<0.000000e+00> : vector<8x128xf32>
    %2 = tpu.matmul %0, %1, %cst {dimension_numbers = #tpu.dot_dimension_numbers<[1], [0], [0], [1], [0, 0, 1, 1], [], []>} : vector<8x32xf32>, vector<32x128xf32>, vector<8x128xf32> -> vector<8x128xf32>
    %c0_3 = arith.constant 0 : index
    %c0_4 = arith.constant 0 : index
    %3 = vector.load %arg3[%c0_3, %c0_4] : memref<1x128xf32, #tpu.memory_space<vmem>>, vector<1x128xf32>
    %4 = vector.broadcast %3 : vector<1x128xf32> to vector<8x128xf32>
    %5 = arith.addf %2, %4 : vector<8x128xf32>
    %cst_5 = arith.constant 0.000000e+00 : f32
    %6 = vector.broadcast %cst_5 : f32 to vector<8x128xf32>
    %7 = arith.maximumf %5, %6 : vector<8x128xf32>
    %c0_6 = arith.constant 0 : index
    %c0_7 = arith.constant 0 : index
    %8 = vector.load %arg4[%c0_6, %c0_7] : memref<128x64xf32, #tpu.memory_space<vmem>>, vector<128x64xf32>
    %cst_8 = arith.constant dense<0.000000e+00> : vector<8x64xf32>
    %9 = tpu.matmul %7, %8, %cst_8 {dimension_numbers = #tpu.dot_dimension_numbers<[1], [0], [0], [1], [0, 0, 1, 1], [], []>} : vector<8x128xf32>, vector<128x64xf32>, vector<8x64xf32> -> vector<8x64xf32>
    %c0_9 = arith.constant 0 : index
    %c0_10 = arith.constant 0 : index
    %10 = vector.load %arg5[%c0_9, %c0_10] : memref<1x64xf32, #tpu.memory_space<vmem>>, vector<1x64xf32>
    %11 = vector.broadcast %10 : vector<1x64xf32> to vector<8x64xf32>
    %12 = arith.addf %9, %11 : vector<8x64xf32>
    %cst_11 = arith.constant 0.000000e+00 : f32
    %13 = vector.broadcast %cst_11 : f32 to vector<8x64xf32>
    %14 = arith.maximumf %12, %13 : vector<8x64xf32>
    %c0_12 = arith.constant 0 : index
    %c0_13 = arith.constant 0 : index
    %15 = vector.load %arg6[%c0_12, %c0_13] : memref<1x64xf32, #tpu.memory_space<vmem>>, vector<1x64xf32>
    %16 = vector.broadcast %15 : vector<1x64xf32> to vector<8x64xf32>
    %17 = arith.mulf %14, %16 : vector<8x64xf32>
    %cst_14 = arith.constant dense<0.000000e+00> : vector<8xf32>
    %18 = vector.multi_reduction <add>, %17, %cst_14 [1] : vector<8x64xf32> to vector<8xf32>
    %19 = vector.shape_cast %18 : vector<8xf32> to vector<8x1xf32>
    %c0_15 = arith.constant 0 : index
    %c0_16 = arith.constant 0 : index
    %20 = vector.load %arg7[%c0_15, %c0_16] : memref<1x1xf32, #tpu.memory_space<vmem>>, vector<1x1xf32>
    %21 = vector.broadcast %20 : vector<1x1xf32> to vector<8x1xf32>
    %22 = arith.addf %19, %21 : vector<8x1xf32>
    %c0_17 = arith.constant 0 : index
    %c0_18 = arith.constant 0 : index
    %23 = vector.load %arg8[%c0_17, %c0_18] : memref<8x1xf32, #tpu.memory_space<vmem>>, vector<8x1xf32>
    tpu.vector_store %arg8[%c0_17, %c0_18], %22 {strides = array<i32>} : memref<8x1xf32, #tpu.memory_space<vmem>>, vector<8x1xf32>,
    return
  }
  func.func @transform_0(%arg0: i32) -> (i32, i32) {
    %c0_i32 = arith.constant 0 : i32
    %c0_i32_0 = arith.constant 0 : i32
    return %arg0, %c0_i32 : i32, i32
  }
  func.func @transform_1(%arg0: i32) -> (i32, i32) {
    %c0_i32 = arith.constant 0 : i32
    %c0_i32_0 = arith.constant 0 : i32
    %c0_i32_1 = arith.constant 0 : i32
    return %c0_i32, %c0_i32_0 : i32, i32
  }
  func.func @transform_2(%arg0: i32) -> (i32, i32) {
    %c0_i32 = arith.constant 0 : i32
    %c0_i32_0 = arith.constant 0 : i32
    %c0_i32_1 = arith.constant 0 : i32
    return %c0_i32, %c0_i32_0 : i32, i32
  }
  func.func @transform_3(%arg0: i32) -> (i32, i32) {
    %c0_i32 = arith.constant 0 : i32
    %c0_i32_0 = arith.constant 0 : i32
    %c0_i32_1 = arith.constant 0 : i32
    return %c0_i32, %c0_i32_0 : i32, i32
  }
  func.func @transform_4(%arg0: i32) -> (i32, i32) {
    %c0_i32 = arith.constant 0 : i32
    %c0_i32_0 = arith.constant 0 : i32
    %c0_i32_1 = arith.constant 0 : i32
    return %c0_i32, %c0_i32_0 : i32, i32
  }
  func.func @transform_5(%arg0: i32) -> (i32, i32) {
    %c0_i32 = arith.constant 0 : i32
    %c0_i32_0 = arith.constant 0 : i32
    %c0_i32_1 = arith.constant 0 : i32
    return %c0_i32, %c0_i32_0 : i32, i32
  }
  func.func @transform_6(%arg0: i32) -> (i32, i32) {
    %c0_i32 = arith.constant 0 : i32
    %c0_i32_0 = arith.constant 0 : i32
    %c0_i32_1 = arith.constant 0 : i32
    return %c0_i32, %c0_i32_0 : i32, i32
  }
  func.func @transform_7(%arg0: i32) -> (i32, i32) {
    %c0_i32 = arith.constant 0 : i32
    %c0_i32_0 = arith.constant 0 : i32
    return %arg0, %c0_i32 : i32, i32
  }
}

</mosaic_0001>

<llo_original>
// kernel: tpu_custom_call.1
$region0: #{tpu_custom_call.1}
  #allocation0 [shape = 'u32[]', space=smem, size = 0x4, offset = 0x4, fixed_abs, tag = 'smem constant byte address 0x4 - core index']
  #allocation1 [shape = 'u32[144,128]{1,0:T(1,128)}', space=vmem, size = 0x12000, scoped, tag = 'internal scratch']
  #allocation2 [shape = 'f32[1,1]{1,0:T(1,128)S(1)}', space=vmem, size = 0x200, scoped, tag = 'scoped memory for tpu_custom_call.1']
  %s0 = inlined_call_operand.vmem [shape: f32[8,32], index: 0, kind: input, shape index: {}]
  %s1 = inlined_call_operand.vmem [shape: f32[32,128], index: 1, kind: input, shape index: {}]
  %s2 = inlined_call_operand.vmem [shape: f32[1,128], index: 2, kind: input, shape index: {}]
  %s3 = inlined_call_operand.vmem [shape: f32[128,64], index: 3, kind: input, shape index: {}]
  %s4 = inlined_call_operand.vmem [shape: f32[1,64], index: 4, kind: input, shape index: {}]
  %s5 = inlined_call_operand.vmem [shape: f32[1,64], index: 5, kind: input, shape index: {}]
  %s6 = inlined_call_operand.<no memory space> [shape: f32[1,1], index: 6, kind: input, shape index: {}]
  %s7 = inlined_call_operand.vmem [shape: f32[8,1], index: 7, kind: output, shape index: {}]
  %s8 = sld [smem:[#allocation0]]
  $region38: #{tpu_custom_call.1} parent=0
    _
  %s10 = ssub.s32 1, %s8
  %s11 = scalar_select 0, %s10, %s8
  %v12 = vstv %s6
  %13 = vst [vmem:[#allocation2] sm:$0x1] %v12
  // Predicated region
  $region2: #{tpu_custom_call.1} parent=0 // pred_check
    _
  $region3: #{tpu_custom_call.1} parent=0 // pred_check_branch
    %15 = sbr.rel (0) target = $region5
  $region4: #{tpu_custom_call.1} parent=0 // pred_region
    _
  $region5: #{tpu_custom_call.1} parent=0 // pred_fallthru
    _
  // Predicated region
  $region6: #{tpu_custom_call.1} parent=0 // pred_check
    _
  $region7: #{tpu_custom_call.1} parent=0 // pred_check_branch
    %17 = sbr.rel (0) target = $region9
  $region8: #{tpu_custom_call.1} parent=0 // pred_region
    _
  $region9: #{tpu_custom_call.1} parent=0 // pred_fallthru
    _
  // Predicated region
  $region10: #{tpu_custom_call.1} parent=0 // pred_check
    _
  $region11: #{tpu_custom_call.1} parent=0 // pred_check_branch
    %19 = sbr.rel (0) target = $region13
  $region12: #{tpu_custom_call.1} parent=0 // pred_region
    _
  $region13: #{tpu_custom_call.1} parent=0 // pred_fallthru
    _
  // Predicated region
  $region14: #{tpu_custom_call.1} parent=0 // pred_check
    _
  $region15: #{tpu_custom_call.1} parent=0 // pred_check_branch
    %21 = sbr.rel (0) target = $region17
  $region16: #{tpu_custom_call.1} parent=0 // pred_region
    _
  $region17: #{tpu_custom_call.1} parent=0 // pred_fallthru
    _
  // Predicated region
  $region18: #{tpu_custom_call.1} parent=0 // pred_check
    _
  $region19: #{tpu_custom_call.1} parent=0 // pred_check_branch
    %23 = sbr.rel (0) target = $region21
  $region20: #{tpu_custom_call.1} parent=0 // pred_region
    _
  $region21: #{tpu_custom_call.1} parent=0 // pred_fallthru
    _
  // Predicated region
  $region22: #{tpu_custom_call.1} parent=0 // pred_check
    _
  $region23: #{tpu_custom_call.1} parent=0 // pred_check_branch
    %25 = sbr.rel (0) target = $region25
  $region24: #{tpu_custom_call.1} parent=0 // pred_region
    _
  $region25: #{tpu_custom_call.1} parent=0 // pred_fallthru
    _
  // Predicated region
  $region26: #{tpu_custom_call.1} parent=0 // pred_check
    _
  $region27: #{tpu_custom_call.1} parent=0 // pred_check_branch
    %27 = sbr.rel (0) target = $region29
  $region28: #{tpu_custom_call.1} parent=0 // pred_region
    _
  $region29: #{tpu_custom_call.1} parent=0 // pred_fallthru
    _
  %v28 = vld [vmem:[%s0] sm:$0xff]
  %v29 = vld [vmem:[%s1] sm:$0xff]
  %v30 = vld [vmem:[%s1 + $0x8] sm:$0xff]
  %v31 = vld [vmem:[%s1 + $0x10] sm:$0xff]
  %v32 = vld [vmem:[%s1 + $0x18] sm:$0xff]
  %v33 = vld [vmem:[%s2] sm:$0x1]
  %v35 = vlaneseq
  %v36 = vshrl.u32 %v35, 7
  %v37 = vsub.s32 0, %v36
  %v38 = vrot.slane %v33, %v37
  %vm40 = vcmask 261120
  %v42 = vsel %vm40, %v28, 0
  %44 = vmatprep.subr.mxu0 0.0
  %45 = vmatpush1.msra.mxu0 0.0
  %46 = vmatprep.subr.mxu0 0.0
  %47 = vmatpush1.msra.mxu0 0.0
  %48 = vmatprep.subr.mxu0 0.0
  %49 = vmatpush1.msra.mxu0 0.0
  %50 = vmatprep.subr.mxu0 0.0
  %51 = vmatpush1.msra.mxu0 0.0
  %52 = vmatprep.subr.mxu0 0.0
  %53 = vmatpush1.msra.mxu0 0.0
  %54 = vmatprep.subr.mxu0 0.0
  %55 = vmatpush1.msra.mxu0 0.0
  %56 = vmatprep.subr.mxu0 0.0
  %57 = vmatpush1.msra.mxu0 0.0
  %58 = vmatprep.subr.mxu0 0.0
  %59 = vmatpush1.msra.mxu0 0.0
  %60 = vmatprep.subr.mxu0 0.0
  %61 = vmatpush1.msra.mxu0 0.0
  %62 = vmatprep.subr.mxu0 0.0
  %63 = vmatpush1.msra.mxu0 0.0
  %64 = vmatprep.subr.mxu0 0.0
  %65 = vmatpush1.msra.mxu0 0.0
  %66 = vmatprep.subr.mxu0 0.0
  %67 = vmatpush1.msra.mxu0 0.0
  %68 = vmatprep.subr.mxu0 0.0
  %69 = vmatpush1.msra.mxu0 %v32
  %70 = vmatprep.subr.mxu0 0.0
  %71 = vmatpush1.msra.mxu0 %v31
  %72 = vmatprep.subr.mxu0 0.0
  %73 = vmatpush1.msra.mxu0 %v30
  %74 = vmatprep.subr.mxu0 0.0
  %75 = vmatpush1.msra.mxu0 %v29
  %76 = vmatprep.subr.mxu0 0.0
  %77 = vmatpush2.msra.mxu0 0.0
  %78 = vmatprep.subr.mxu0 0.0
  %79 = vmatpush2.msra.mxu0 0.0
  %80 = vmatprep.subr.mxu0 0.0
  %81 = vmatpush2.msra.mxu0 0.0
  %82 = vmatprep.subr.mxu0 0.0
  %83 = vmatpush2.msra.mxu0 0.0
  %84 = vmatprep.subr.mxu0 0.0
  %85 = vmatpush2.msra.mxu0 0.0
  %86 = vmatprep.subr.mxu0 0.0
  %87 = vmatpush2.msra.mxu0 0.0
  %88 = vmatprep.subr.mxu0 0.0
  %89 = vmatpush2.msra.mxu0 0.0
  %90 = vmatprep.subr.mxu0 0.0
  %91 = vmatpush2.msra.mxu0 0.0
  %92 = vmatprep.subr.mxu0 0.0
  %93 = vmatpush2.msra.mxu0 0.0
  %94 = vmatprep.subr.mxu0 0.0
  %95 = vmatpush2.msra.mxu0 0.0
  %96 = vmatprep.subr.mxu0 0.0
  %97 = vmatpush2.msra.mxu0 0.0
  %98 = vmatprep.subr.mxu0 0.0
  %99 = vmatpush2.msra.mxu0 0.0
  %100 = vmatprep.subr.mxu0 0.0
  %101 = vmatpush2.msra.mxu0 0.0
  %102 = vmatprep.subr.mxu0 0.0
  %103 = vmatpush2.msra.mxu0 0.0
  %104 = vmatprep.subr.mxu0 0.0
  %105 = vmatpush2.msra.mxu0 0.0
  %106 = vmatprep.subr.mxu0 0.0
  %107 = vmatpush2.msra.mxu0 0.0
  %108 = vmatprep.mubr.f32.mxu0 0.0
  %109 = vmatmul.mubr.f32.gmra.mxu0 %v42
  %v110 = vpop.f32.mrf.mxu0
  %v111 = vadd.f32 %v38, %v110
  %v112 = vpop.f32.mrf.mxu0
  %113 = vdwg.mxu0
  %v114 = vmax.f32 %v111, 0.0
  %v115 = vld [vmem:[%s3] sm:$0xff]
  %v116 = vld [vmem:[%s3 + $0x8] sm:$0xff]
  %v117 = vld [vmem:[%s3 + $0x10] sm:$0xff]
  %v118 = vld [vmem:[%s3 + $0x18] sm:$0xff]
  %v119 = vld [vmem:[%s3 + $0x20] sm:$0xff]
  %v120 = vld [vmem:[%s3 + $0x28] sm:$0xff]
  %v121 = vld [vmem:[%s3 + $0x30] sm:$0xff]
  %v122 = vld [vmem:[%s3 + $0x38] sm:$0xff]
  %v123 = vld [vmem:[%s3 + $0x40] sm:$0xff]
  %v124 = vld [vmem:[%s3 + $0x48] sm:$0xff]
  %v125 = vld [vmem:[%s3 + $0x50] sm:$0xff]
  %v126 = vld [vmem:[%s3 + $0x58] sm:$0xff]
  %v127 = vld [vmem:[%s3 + $0x60] sm:$0xff]
  %v128 = vld [vmem:[%s3 + $0x68] sm:$0xff]
  %v129 = vld [vmem:[%s3 + $0x70] sm:$0xff]
  %v130 = vld [vmem:[%s3 + $0x78] sm:$0xff]
  %v131 = vld [vmem:[%s4] sm:$0x1]
  %v133 = vlaneseq
  %v134 = vshrl.u32 %v133, 7
  %v135 = vsub.s32 0, %v134
  %v136 = vrot.slane %v131, %v135
  %138 = vmatprep.subr.mxu0 0.0
  %139 = vmatpush1.msra.mxu0 %v130
  %140 = vmatprep.subr.mxu0 0.0
  %141 = vmatpush1.msra.mxu0 %v129
  %142 = vmatprep.subr.mxu0 0.0
  %143 = vmatpush1.msra.mxu0 %v128
  %144 = vmatprep.subr.mxu0 0.0
  %145 = vmatpush1.msra.mxu0 %v127
  %146 = vmatprep.subr.mxu0 0.0
  %147 = vmatpush1.msra.mxu0 %v126
  %148 = vmatprep.subr.mxu0 0.0
  %149 = vmatpush1.msra.mxu0 %v125
  %150 = vmatprep.subr.mxu0 0.0
  %151 = vmatpush1.msra.mxu0 %v124
  %152 = vmatprep.subr.mxu0 0.0
  %153 = vmatpush1.msra.mxu0 %v123
  %154 = vmatprep.subr.mxu0 0.0
  %155 = vmatpush1.msra.mxu0 %v122
  %156 = vmatprep.subr.mxu0 0.0
  %157 = vmatpush1.msra.mxu0 %v121
  %158 = vmatprep.subr.mxu0 0.0
  %159 = vmatpush1.msra.mxu0 %v120
  %160 = vmatprep.subr.mxu0 0.0
  %161 = vmatpush1.msra.mxu0 %v119
  %162 = vmatprep.subr.mxu0 0.0
  %163 = vmatpush1.msra.mxu0 %v118
  %164 = vmatprep.subr.mxu0 0.0
  %165 = vmatpush1.msra.mxu0 %v117
  %166 = vmatprep.subr.mxu0 0.0
  %167 = vmatpush1.msra.mxu0 %v116
  %168 = vmatprep.subr.mxu0 0.0
  %169 = vmatpush1.msra.mxu0 %v115
  %170 = vmatprep.subr.mxu0 0.0
  %171 = vmatpush2.msra.mxu0 0.0
  %172 = vmatprep.subr.mxu0 0.0
  %173 = vmatpush2.msra.mxu0 0.0
  %174 = vmatprep.subr.mxu0 0.0
  %175 = vmatpush2.msra.mxu0 0.0
  %176 = vmatprep.subr.mxu0 0.0
  %177 = vmatpush2.msra.mxu0 0.0
  %178 = vmatprep.subr.mxu0 0.0
  %179 = vmatpush2.msra.mxu0 0.0
  %180 = vmatprep.subr.mxu0 0.0
  %181 = vmatpush2.msra.mxu0 0.0
  %182 = vmatprep.subr.mxu0 0.0
  %183 = vmatpush2.msra.mxu0 0.0
  %184 = vmatprep.subr.mxu0 0.0
  %185 = vmatpush2.msra.mxu0 0.0
  %186 = vmatprep.subr.mxu0 0.0
  %187 = vmatpush2.msra.mxu0 0.0
  %188 = vmatprep.subr.mxu0 0.0
  %189 = vmatpush2.msra.mxu0 0.0
  %190 = vmatprep.subr.mxu0 0.0
  %191 = vmatpush2.msra.mxu0 0.0
  %192 = vmatprep.subr.mxu0 0.0
  %193 = vmatpush2.msra.mxu0 0.0
  %194 = vmatprep.subr.mxu0 0.0
  %195 = vmatpush2.msra.mxu0 0.0
  %196 = vmatprep.subr.mxu0 0.0
  %197 = vmatpush2.msra.mxu0 0.0
  %198 = vmatprep.subr.mxu0 0.0
  %199 = vmatpush2.msra.mxu0 0.0
  %200 = vmatprep.subr.mxu0 0.0
  %201 = vmatpush2.msra.mxu0 0.0
  %202 = vmatprep.mubr.f32.mxu0 0.0
  %203 = vmatmul.mubr.f32.gmra.mxu0 %v114
  %v204 = vpop.f32.mrf.mxu0
  %v205 = vadd.f32 %v136, %v204
  %v206 = vpop.f32.mrf.mxu0
  %207 = vdwg.mxu0
  %v208 = vmax.f32 %v205, 0.0
  %v209 = vld [vmem:[%s5] sm:$0x1]
  %v211 = vlaneseq
  %v212 = vshrl.u32 %v211, 7
  %v213 = vsub.s32 0, %v212
  %v214 = vrot.slane %v209, %v213
  %v216 = vmul.f32 %v208, %v214
  %vm217 = vcmask 523264
  %v218 = vsel %vm217, %v216, 0.0
  %219 = vadd.xlane.f32.xlu0 %v218
  %v220 = vpop.xlane.xlu0 %219
  %v221 = vld [vmem:[#allocation2] sm:$0x1]
  %v223 = vlaneseq
  %v224 = vshrl.u32 %v223, 7
  %v225 = vsub.s32 0, %v224
  %v226 = vrot.slane %v221, %v225
  %v228 = vadd.f32 %v220, %v226
  %vm229 = vcmask 7168
  %230 = vst.msk [vmem:[%s7] sm:$0xff] %vm229, %v228
  // Predicated region
  $region30: #{tpu_custom_call.1} parent=0 // pred_check
    _
  $region31: #{tpu_custom_call.1} parent=0 // pred_check_branch
    %232 = sbr.rel (0) target = $region33
  $region32: #{tpu_custom_call.1} parent=0 // pred_region
    _
  $region33: #{tpu_custom_call.1} parent=0 // pred_fallthru
    _
  // Predicated region
  $region34: #{tpu_custom_call.1} parent=0 // pred_check
    _
  $region35: #{tpu_custom_call.1} parent=0 // pred_check_branch
    %234 = sbr.rel (0) target = $region37
  $region36: #{tpu_custom_call.1} parent=0 // pred_region
    _
  $region37: #{tpu_custom_call.1} parent=0 // pred_fallthru
    _

</llo_original>
